<compile_context>
chip_gen: v7x
topology: tpu7x:2x2x1
jax: 0.10.0
libtpu: 0.0.40
codegen_flags: <defaults>
</compile_context>

<pallas_src>
import math

import jax
import jax.numpy as jnp
from jax.experimental import pallas as pl
from jax.experimental.pallas import tpu as pltpu


def _vmem_capacity_bytes():
    """Per-TensorCore VMEM capacity; falls back to 64 MiB (v7x) if unknown."""
    try:
        cap = getattr(pltpu.get_tpu_info(), "vmem_capacity_bytes", None)
        if cap:
            return int(cap)
    except Exception:
        pass
    return 64 << 20


def _pick_bb(B, Lq, per_b, fixed, budget, need_8_or_full):
    """Largest useful batch tile that fits the VMEM budget.

    Prefers the smallest tile reaching >=256 flattened rows (fills the 256-wide MXU
    on v6e/v7x while keeping grid steps for megacore sharding); otherwise the largest
    tile that still leaves >=2 grid steps; otherwise the largest that fits.
    """
    divs = [d for d in range(1, B + 1) if B % d == 0]
    cand = [d for d in divs if fixed + d * per_b <= budget]
    if need_8_or_full:
        # Lane-dense 2-D output block: sublane dim must be a multiple of 8 or full B.
        cand = [d for d in cand if d % 8 == 0 or d == B]
    if not cand:
        return None
    good = [d for d in cand if d * Lq >= 256]
    if good:
        return min(good)
    multi = [d for d in cand if (B // d) >= 2]
    return max(multi) if multi else max(cand)


def _make_kernel(is_layer_norm, eps, ln_eps, lq, d, lane_dense):
    scale = 1.0 / (math.sqrt(max(1.0, float(d))) + float(eps))
    # Collapsing (bb, Lq, D) -> (bb*Lq, D) is a layout-preserving sublane concat
    # when Lq % 8 == 0; otherwise keep the FFN as a batched einsum.
    flatten = (lq % 8 == 0)

    def _body(q_ref, k_ref, v_ref, w1t_ref, b1_ref, w2t_ref, b2_ref, gamma, beta, o_ref):
        q = q_ref[...]            # (bb, Lq, D)  f32
        k = k_ref[...]            # (bb, Lk, D)  f32
        v = v_ref[...]            # (bb, Lk, D)  f32
        bb = q.shape[0]

        # Fold the 1/(sqrt(D)+eps) scale into Q (bb*Lq*D elems instead of bb*Lq*Lk),
        # then cast the MXU operands to bf16 (VPU pack ops, accumulation stays f32).
        qb = (q * scale).astype(jnp.bfloat16)
        kb = k.astype(jnp.bfloat16)
        vb = v.astype(jnp.bfloat16)

        # Attention scores: contract on D (no transposed VMEM operand).
        s = jnp.einsum("bqd,bkd->bqk", qb, kb,
                       preferred_element_type=jnp.float32)          # (bb, Lq, Lk)

        # Numerically stable softmax; denominator via approx reciprocal on the EUP.
        s_max = jnp.max(s, axis=-1, keepdims=True)
        p = jnp.exp(s - s_max)
        p = p * pl.reciprocal(jnp.sum(p, axis=-1, keepdims=True), approx=True)

        v_att = jnp.einsum("bqk,bkd->bqd", p.astype(jnp.bfloat16), vb,
                           preferred_element_type=jnp.float32)       # (bb, Lq, D)

        # Residual with the full-precision Q (matches the PyTorch module).
        x = q + v_att

        def layer_norm(t):
            mu = jnp.mean(t, axis=-1, keepdims=True)
            var = jnp.mean((t - mu) * (t - mu), axis=-1, keepdims=True)
            return (t - mu) * jax.lax.rsqrt(var + ln_eps) * gamma + beta

        if is_layer_norm:
            x = layer_norm(x)

        w1t = w1t_ref[...]
        w2t = w2t_ref[...]
        b1 = b1_ref[...]
        b2 = b2_ref[...]

        if flatten:
            # One (bb*Lq, D) x (D, D) MXU matmul per FFN layer (weights pre-transposed).
            x2 = x.reshape(-1, d)
            h = jnp.dot(x2.astype(jnp.bfloat16), w1t,
                        preferred_element_type=jnp.float32) + b1
            h = jnp.maximum(h, 0.0)
            out = jnp.dot(h.astype(jnp.bfloat16), w2t,
                          preferred_element_type=jnp.float32) + b2
            out = out + x2
        else:
            h = jnp.einsum("bqd,df->bqf", x.astype(jnp.bfloat16), w1t,
                           preferred_element_type=jnp.float32) + b1
            h = jnp.maximum(h, 0.0)
            out = jnp.einsum("bqd,df->bqf", h.astype(jnp.bfloat16), w2t,
                             preferred_element_type=jnp.float32) + b2
            out = out + x

        if is_layer_norm:
            out = layer_norm(out)

        if lane_dense:
            # Lane-dense store: last dim Lq*D is a multiple of 128 -> unmasked vst.
            o_ref[...] = out.reshape(bb, lq * d).astype(o_ref.dtype)
        elif flatten:
            o_ref[...] = out.reshape(bb, lq, d).astype(o_ref.dtype)
        else:
            o_ref[...] = out.astype(o_ref.dtype)

    if is_layer_norm:
        def kernel(q_ref, k_ref, v_ref, w1t_ref, b1_ref, w2t_ref, b2_ref,
                   g_ref, beta_ref, o_ref):
            _body(q_ref, k_ref, v_ref, w1t_ref, b1_ref, w2t_ref, b2_ref,
                  g_ref[...], beta_ref[...], o_ref)
    else:
        def kernel(q_ref, k_ref, v_ref, w1t_ref, b1_ref, w2t_ref, b2_ref, o_ref):
            _body(q_ref, k_ref, v_ref, w1t_ref, b1_ref, w2t_ref, b2_ref,
                  None, None, o_ref)
    return kernel


def transformer_block(Q, K, V, params, *, is_layer_norm=False, eps=1e-8, ln_eps=1e-5):
    """Pallas implementation of TransformerBlock.forward.

    Q: (B, Lq, D), K: (B, Lk, D), V: (B, Lk, D)  -> (B, Lq, D) float32
    params: dict with w1 (D,D), b1 (D,), w2 (D,D), b2 (D,), gamma (D,), beta (D,)
    """
    B, Lq, D = Q.shape
    _, Lk, _ = K.shape

    cap = _vmem_capacity_bytes()
    budget = int(0.45 * cap)

    # f32 Q/K/V are read directly by the kernel (bf16 casts happen in-kernel).
    Q = Q.astype(jnp.float32)
    K = K.astype(jnp.float32)
    V = V.astype(jnp.float32)

    # PyTorch Linear weight is (out, in); transpose once in HBM (one-time XLA op)
    # so the kernel computes x @ w_t with no in-kernel transpose/relayout.
    w1t = params["w1"].T.astype(jnp.bfloat16)
    w2t = params["w2"].T.astype(jnp.bfloat16)
    b1 = params["b1"].reshape(1, D).astype(jnp.float32)
    b2 = params["b2"].reshape(1, D).astype(jnp.float32)
    gamma = params["gamma"].reshape(1, D).astype(jnp.float32)
    beta = params["beta"].reshape(1, D).astype(jnp.float32)

    # VMEM footprint model (bytes): double-buffered f32 Q/K/V/out blocks, f32 S/P and
    # X/H/FFN intermediates per batch element; resident weights counted conservatively.
    per_b = 4 * (2 * Lq * D + 4 * Lk * D + 2 * Lq * D + 2 * Lq * Lk + 5 * Lq * D)
    fixed = 2 * (2 * D * D * 2 + 4 * D * 4) + (1 << 20)

    def run(lane_dense, single_buffer_invariants):
        bb = _pick_bb(B, Lq, per_b, fixed, budget, need_8_or_full=lane_dense)
        if bb is None:
            lane_dense_local = False
            bb = _pick_bb(B, Lq, per_b, fixed, budget, need_8_or_full=False) or 1
        else:
            lane_dense_local = lane_dense
        grid = (B // bb,)

        def inv_spec(shape):
            zeros = (0,) * len(shape)
            if single_buffer_invariants:
                # Grid-invariant operand: fetched once, single buffer (saves VMEM).
                return pl.BlockSpec(shape, lambda i: zeros,
                                    pipeline_mode=pl.Buffered(1))
            return pl.BlockSpec(shape, lambda i: zeros)

        in_specs = [
            pl.BlockSpec((bb, Lq, D), lambda i: (i, 0, 0)),   # Q (f32)
            pl.BlockSpec((bb, Lk, D), lambda i: (i, 0, 0)),   # K (f32)
            pl.BlockSpec((bb, Lk, D), lambda i: (i, 0, 0)),   # V (f32)
            inv_spec((D, D)),                                 # w1^T (bf16)
            inv_spec((1, D)),                                 # b1  (f32)
            inv_spec((D, D)),                                 # w2^T (bf16)
            inv_spec((1, D)),                                 # b2  (f32)
        ]
        args = [Q, K, V, w1t, b1, w2t, b2]
        if is_layer_norm:
            in_specs += [inv_spec((1, D)), inv_spec((1, D))]
            args += [gamma, beta]

        if lane_dense_local:
            out_specs = pl.BlockSpec((bb, Lq * D), lambda i: (i, 0))
            out_shape = jax.ShapeDtypeStruct((B, Lq * D), jnp.float32)
        else:
            out_specs = pl.BlockSpec((bb, Lq, D), lambda i: (i, 0, 0))
            out_shape = jax.ShapeDtypeStruct((B, Lq, D), jnp.float32)

        # Generation-aware VMEM limit: estimate + modest headroom, capped at ~90% of
        # this chip's physical VMEM (legal on v7x's 64 MiB; big tiles on v5e/v6e).
        est = fixed + bb * per_b
        vmem_limit = int(max(32 << 20, min(est + (8 << 20), int(0.9 * cap))))

        flops = 2 * 2 * B * Lq * Lk * D + 2 * 2 * B * Lq * D * D
        bytes_accessed = ((B * Lq * D + 2 * B * Lk * D) * 4     # f32 Q/K/V
                          + 2 * D * D * 2 + 4 * D * 4           # weights + biases
                          + B * Lq * D * 4)                     # f32 output
        cost = pl.CostEstimate(flops=flops, transcendentals=B * Lq * Lk,
                               bytes_accessed=bytes_accessed)

        kernel = _make_kernel(is_layer_norm, eps, ln_eps, Lq, D, lane_dense_local)

        out = pl.pallas_call(
            kernel,
            out_shape=out_shape,
            grid_spec=pltpu.PrefetchScalarGridSpec(
                num_scalar_prefetch=0,
                grid=grid,
                in_specs=in_specs,
                out_specs=out_specs,
            ),
            compiler_params=pltpu.CompilerParams(
                dimension_semantics=("parallel",),
                vmem_limit_bytes=vmem_limit),
            cost_estimate=cost,
        )(*args)
        return out.reshape(B, Lq, D)

    lane_dense = (D % 128 != 0) and ((Lq * D) % 128 == 0)
    attempts = []
    for cfg in [(lane_dense, True), (lane_dense, False), (False, False)]:
        if cfg not in attempts:
            attempts.append(cfg)
    last_err = None
    for ld, sb in attempts:
        try:
            return run(ld, sb)
        except Exception as e:
            # Fallback for JAX/Mosaic versions that reject the lane-dense store or
            # Buffered(1) pipeline mode; numerics are identical in every config.
            last_err = e
    raise last_err


def init_params(key, input_size):
    """Deterministic parameter init mirroring the module's __init__ shapes.

    linear{1,2}.weight: xavier_normal_, shape (D, D); biases: uniform(-1/sqrt(D), 1/sqrt(D)).
    LayerNorm: gamma=1, beta=0.
    """
    D = input_size
    k1, k2, k3, k4 = jax.random.split(key, 4)
    xavier_std = jnp.sqrt(2.0 / (D + D))
    bound = 1.0 / jnp.sqrt(jnp.float32(D))
    return {
        "w1": xavier_std * jax.random.normal(k1, (D, D), jnp.float32),
        "b1": jax.random.uniform(k2, (D,), jnp.float32, -bound, bound),
        "w2": xavier_std * jax.random.normal(k3, (D, D), jnp.float32),
        "b2": jax.random.uniform(k4, (D,), jnp.float32, -bound, bound),
        "gamma": jnp.ones((D,), jnp.float32),
        "beta": jnp.zeros((D,), jnp.float32),
    }


def _reference(Q, K, V, params, is_layer_norm=False, eps=1e-8, ln_eps=1e-5,
               mimic_bf16=True):
    """Pure-JAX reference of the PyTorch forward.

    With mimic_bf16=True the MXU operands are quantized to bf16 (f32 accumulation),
    matching the kernel's input precision so tolerances stay tight.
    """
    qf = ((lambda t: t.astype(jnp.bfloat16).astype(jnp.float32))
          if mimic_bf16 else (lambda t: t))
    D = Q.shape[-1]
    scale = 1.0 / (math.sqrt(max(1.0, float(D))) + eps)
    s = jnp.einsum("bqd,bkd->bqk", qf(Q * scale), qf(K),
                   preferred_element_type=jnp.float32)
    p = jax.nn.softmax(s, axis=-1)
    v_att = jnp.einsum("bqk,bkd->bqd", qf(p), qf(V), preferred_element_type=jnp.float32)
    w1, w2 = qf(params["w1"]), qf(params["w2"])

    def ln(t):
        mu = jnp.mean(t, axis=-1, keepdims=True)
        var = jnp.mean((t - mu) ** 2, axis=-1, keepdims=True)
        return (t - mu) / jnp.sqrt(var + ln_eps) * params["gamma"] + params["beta"]

    def ffn(x):
        h = jnp.maximum(qf(x) @ w1.T + params["b1"], 0.0)
        return qf(h) @ w2.T + params["b2"]

    x = Q + v_att                       # full-precision Q residual, as in the module
    if is_layer_norm:
        x = ln(x)
        return ln(ffn(x) + x)
    return ffn(x) + x


if __name__ == "__main__":
    # batch, response words, utterance words, embedding dim
    B, Lq, Lk, D = 4, 8, 16, 32

    key = jax.random.PRNGKey(0)
    kq, kk, kv, kp = jax.random.split(key, 4)
    Q = jax.random.normal(kq, (B, Lq, D), jnp.float32)
    K = jax.random.normal(kk, (B, Lk, D), jnp.float32)
    V = jax.random.normal(kv, (B, Lk, D), jnp.float32)
    params = init_params(kp, D)

    # Default path (is_layer_norm=False, like the PyTorch module default).
    out = jax.block_until_ready(transformer_block(Q, K, V, params))
    assert out.shape == (B, Lq, D)
    ref = _reference(Q, K, V, params, is_layer_norm=False)
    max_err = float(jnp.max(jnp.abs(out - ref)))
    assert jnp.allclose(out, ref, atol=3e-2, rtol=3e-2), max_err

    # LayerNorm path.
    out_ln = jax.block_until_ready(
        transformer_block(Q, K, V, params, is_layer_norm=True))
    ref_ln = _reference(Q, K, V, params, is_layer_norm=True)
    max_err_ln = float(jnp.max(jnp.abs(out_ln - ref_ln)))
    assert jnp.allclose(out_ln, ref_ln, atol=5e-2, rtol=5e-2), max_err_ln

    print("KERNEL_OK")
</pallas_src>

<mosaic_0001>
module attributes {stable_mosaic.version = 11 : i64} {
  func.func @kernel(%arg0: i32, %arg1: memref<4x8x32xf32, #tpu.memory_space<vmem>>, %arg2: memref<4x16x32xf32, #tpu.memory_space<vmem>>, %arg3: memref<4x16x32xf32, #tpu.memory_space<vmem>>, %arg4: memref<32x32xbf16, #tpu.memory_space<vmem>>, %arg5: memref<1x32xf32, #tpu.memory_space<vmem>>, %arg6: memref<32x32xbf16, #tpu.memory_space<vmem>>, %arg7: memref<1x32xf32, #tpu.memory_space<vmem>>, %arg8: memref<4x256xf32, #tpu.memory_space<vmem>>) attributes {dimension_semantics = [#tpu.dimension_semantics<parallel>], iteration_bounds = array<i64: 1>, scalar_prefetch = 0 : i64, scratch_operands = 0 : i64, tpu.core_type = #tpu.core_type<tc>, window_params = [{transform_indices = @transform_0, window_bounds = array<i64: 4, 8, 32>}, {transform_indices = @transform_1, window_bounds = array<i64: 4, 16, 32>}, {transform_indices = @transform_2, window_bounds = array<i64: 4, 16, 32>}, {pipeline_mode = #tpu.pipeline_mode<synchronous>, transform_indices = @transform_3, window_bounds = array<i64: 32, 32>}, {pipeline_mode = #tpu.pipeline_mode<synchronous>, transform_indices = @transform_4, window_bounds = array<i64: 1, 32>}, {pipeline_mode = #tpu.pipeline_mode<synchronous>, transform_indices = @transform_5, window_bounds = array<i64: 32, 32>}, {pipeline_mode = #tpu.pipeline_mode<synchronous>, transform_indices = @transform_6, window_bounds = array<i64: 1, 32>}, {transform_indices = @transform_7, window_bounds = array<i64: 4, 256>}]} {
    %c0 = arith.constant 0 : index
    %c0_0 = arith.constant 0 : index
    %c0_1 = arith.constant 0 : index
    %0 = vector.load %arg1[%c0, %c0_0, %c0_1] : memref<4x8x32xf32, #tpu.memory_space<vmem>>, vector<4x8x32xf32>
    %c0_2 = arith.constant 0 : index
    %c0_3 = arith.constant 0 : index
    %c0_4 = arith.constant 0 : index
    %1 = vector.load %arg2[%c0_2, %c0_3, %c0_4] : memref<4x16x32xf32, #tpu.memory_space<vmem>>, vector<4x16x32xf32>
    %c0_5 = arith.constant 0 : index
    %c0_6 = arith.constant 0 : index
    %c0_7 = arith.constant 0 : index
    %2 = vector.load %arg3[%c0_5, %c0_6, %c0_7] : memref<4x16x32xf32, #tpu.memory_space<vmem>>, vector<4x16x32xf32>
    %cst = arith.constant 0.176776692 : f32
    %3 = vector.broadcast %cst : f32 to vector<4x8x32xf32>
    %4 = arith.mulf %0, %3 : vector<4x8x32xf32>
    %5 = arith.truncf %4 : vector<4x8x32xf32> to vector<4x8x32xbf16>
    %6 = arith.truncf %1 : vector<4x16x32xf32> to vector<4x16x32xbf16>
    %7 = arith.truncf %2 : vector<4x16x32xf32> to vector<4x16x32xbf16>
    "tpu.trace_start"() <{level = 10 : i32, message = "bqd,bkd->bqk"}> : () -> ()
    %cst_8 = arith.constant dense<0.000000e+00> : vector<4x8x16xf32>
    %8 = tpu.matmul %5, %6, %cst_8 {dimension_numbers = #tpu.dot_dimension_numbers<[2], [2], [1], [1], [0, 0, 0, 1, 1, 1], [0], [0]>} : vector<4x8x32xbf16>, vector<4x16x32xbf16>, vector<4x8x16xf32> -> vector<4x8x16xf32>
    "tpu.trace_stop"() : () -> ()
    %cst_9 = arith.constant dense<0xFF800000> : vector<4x8xf32>
    %9 = vector.multi_reduction <maximumf>, %8, %cst_9 [2] : vector<4x8x16xf32> to vector<4x8xf32>
    %10 = vector.shape_cast %9 : vector<4x8xf32> to vector<4x8x1xf32>
    %11 = vector.broadcast %10 : vector<4x8x1xf32> to vector<4x8x16xf32>
    %12 = arith.subf %8, %11 : vector<4x8x16xf32>
    %13 = math.exp %12 : vector<4x8x16xf32>
    %cst_10 = arith.constant dense<0.000000e+00> : vector<4x8xf32>
    %14 = vector.multi_reduction <add>, %13, %cst_10 [2] : vector<4x8x16xf32> to vector<4x8xf32>
    %15 = vector.shape_cast %14 : vector<4x8xf32> to vector<4x8x1xf32>
    %16 = tpu.reciprocal %15 {approx = true} : vector<4x8x1xf32> -> vector<4x8x1xf32>
    %17 = vector.broadcast %16 : vector<4x8x1xf32> to vector<4x8x16xf32>
    %18 = arith.mulf %13, %17 : vector<4x8x16xf32>
    %19 = arith.truncf %18 : vector<4x8x16xf32> to vector<4x8x16xbf16>
    "tpu.trace_start"() <{level = 10 : i32, message = "bqk,bkd->bqd"}> : () -> ()
    %cst_11 = arith.constant dense<0.000000e+00> : vector<4x8x32xf32>
    %20 = tpu.matmul %19, %7, %cst_11 {dimension_numbers = #tpu.dot_dimension_numbers<[2], [1], [1], [2], [0, 0, 0, 1, 1, 2], [0], [0]>} : vector<4x8x16xbf16>, vector<4x16x32xbf16>, vector<4x8x32xf32> -> vector<4x8x32xf32>
    "tpu.trace_stop"() : () -> ()
    %21 = arith.addf %0, %20 : vector<4x8x32xf32>
    %c0_12 = arith.constant 0 : index
    %c0_13 = arith.constant 0 : index
    %22 = vector.load %arg4[%c0_12, %c0_13] : memref<32x32xbf16, #tpu.memory_space<vmem>>, vector<32x32xbf16>
    %c0_14 = arith.constant 0 : index
    %c0_15 = arith.constant 0 : index
    %23 = vector.load %arg6[%c0_14, %c0_15] : memref<32x32xbf16, #tpu.memory_space<vmem>>, vector<32x32xbf16>
    %c0_16 = arith.constant 0 : index
    %c0_17 = arith.constant 0 : index
    %24 = vector.load %arg5[%c0_16, %c0_17] : memref<1x32xf32, #tpu.memory_space<vmem>>, vector<1x32xf32>
    %c0_18 = arith.constant 0 : index
    %c0_19 = arith.constant 0 : index
    %25 = vector.load %arg7[%c0_18, %c0_19] : memref<1x32xf32, #tpu.memory_space<vmem>>, vector<1x32xf32>
    %26 = vector.shape_cast %21 : vector<4x8x32xf32> to vector<32x32xf32>
    %27 = arith.truncf %26 : vector<32x32xf32> to vector<32x32xbf16>
    %cst_20 = arith.constant dense<0.000000e+00> : vector<32x32xf32>
    %28 = tpu.matmul %27, %22, %cst_20 {dimension_numbers = #tpu.dot_dimension_numbers<[1], [0], [0], [1], [0, 0, 1, 1], [], []>} : vector<32x32xbf16>, vector<32x32xbf16>, vector<32x32xf32> -> vector<32x32xf32>
    %29 = vector.broadcast %24 : vector<1x32xf32> to vector<32x32xf32>
    %30 = arith.addf %28, %29 : vector<32x32xf32>
    %cst_21 = arith.constant 0.000000e+00 : f32
    %31 = vector.broadcast %cst_21 : f32 to vector<32x32xf32>
    %32 = arith.maximumf %30, %31 : vector<32x32xf32>
    %33 = arith.truncf %32 : vector<32x32xf32> to vector<32x32xbf16>
    %cst_22 = arith.constant dense<0.000000e+00> : vector<32x32xf32>
    %34 = tpu.matmul %33, %23, %cst_22 {dimension_numbers = #tpu.dot_dimension_numbers<[1], [0], [0], [1], [0, 0, 1, 1], [], []>} : vector<32x32xbf16>, vector<32x32xbf16>, vector<32x32xf32> -> vector<32x32xf32>
    %35 = vector.broadcast %25 : vector<1x32xf32> to vector<32x32xf32>
    %36 = arith.addf %34, %35 : vector<32x32xf32>
    %37 = arith.addf %36, %26 : vector<32x32xf32>
    %38 = vector.shape_cast %37 : vector<32x32xf32> to vector<4x256xf32>
    %c0_23 = arith.constant 0 : index
    %c0_24 = arith.constant 0 : index
    %39 = vector.load %arg8[%c0_23, %c0_24] : memref<4x256xf32, #tpu.memory_space<vmem>>, vector<4x256xf32>
    tpu.vector_store %arg8[%c0_23, %c0_24], %38 {strides = array<i32>} : memref<4x256xf32, #tpu.memory_space<vmem>>, vector<4x256xf32>,
    return
  }
  func.func @transform_0(%arg0: i32) -> (i32, i32, i32) {
    %c0_i32 = arith.constant 0 : i32
    %c0_i32_0 = arith.constant 0 : i32
    %c0_i32_1 = arith.constant 0 : i32
    return %arg0, %c0_i32, %c0_i32_0 : i32, i32, i32
  }
  func.func @transform_1(%arg0: i32) -> (i32, i32, i32) {
    %c0_i32 = arith.constant 0 : i32
    %c0_i32_0 = arith.constant 0 : i32
    %c0_i32_1 = arith.constant 0 : i32
    return %arg0, %c0_i32, %c0_i32_0 : i32, i32, i32
  }
  func.func @transform_2(%arg0: i32) -> (i32, i32, i32) {
    %c0_i32 = arith.constant 0 : i32
    %c0_i32_0 = arith.constant 0 : i32
    %c0_i32_1 = arith.constant 0 : i32
    return %arg0, %c0_i32, %c0_i32_0 : i32, i32, i32
  }
  func.func @transform_3(%arg0: i32) -> (i32, i32) {
    %c0_i32 = arith.constant 0 : i32
    %c0_i32_0 = arith.constant 0 : i32
    %c0_i32_1 = arith.constant 0 : i32
    return %c0_i32, %c0_i32_0 : i32, i32
  }
  func.func @transform_4(%arg0: i32) -> (i32, i32) {
    %c0_i32 = arith.constant 0 : i32
    %c0_i32_0 = arith.constant 0 : i32
    %c0_i32_1 = arith.constant 0 : i32
    return %c0_i32, %c0_i32_0 : i32, i32
  }
  func.func @transform_5(%arg0: i32) -> (i32, i32) {
    %c0_i32 = arith.constant 0 : i32
    %c0_i32_0 = arith.constant 0 : i32
    %c0_i32_1 = arith.constant 0 : i32
    return %c0_i32, %c0_i32_0 : i32, i32
  }
  func.func @transform_6(%arg0: i32) -> (i32, i32) {
    %c0_i32 = arith.constant 0 : i32
    %c0_i32_0 = arith.constant 0 : i32
    %c0_i32_1 = arith.constant 0 : i32
    return %c0_i32, %c0_i32_0 : i32, i32
  }
  func.func @transform_7(%arg0: i32) -> (i32, i32) {
    %c0_i32 = arith.constant 0 : i32
    %c0_i32_0 = arith.constant 0 : i32
    return %arg0, %c0_i32 : i32, i32
  }
}

module attributes {stable_mosaic.version = 11 : i64} {
  func.func @kernel(%arg0: i32, %arg1: memref<4x8x32xf32, #tpu.memory_space<vmem>>, %arg2: memref<4x16x32xf32, #tpu.memory_space<vmem>>, %arg3: memref<4x16x32xf32, #tpu.memory_space<vmem>>, %arg4: memref<32x32xbf16, #tpu.memory_space<vmem>>, %arg5: memref<1x32xf32, #tpu.memory_space<vmem>>, %arg6: memref<32x32xbf16, #tpu.memory_space<vmem>>, %arg7: memref<1x32xf32, #tpu.memory_space<vmem>>, %arg8: memref<4x256xf32, #tpu.memory_space<vmem>>) attributes {dimension_semantics = [#tpu.dimension_semantics<parallel>], iteration_bounds = array<i64: 1>, scalar_prefetch = 0 : i64, scratch_operands = 0 : i64, tpu.core_type = #tpu.core_type<tc>, window_params = [{transform_indices = @transform_0, window_bounds = array<i64: 4, 8, 32>}, {transform_indices = @transform_1, window_bounds = array<i64: 4, 16, 32>}, {transform_indices = @transform_2, window_bounds = array<i64: 4, 16, 32>}, {pipeline_mode = #tpu.pipeline_mode<synchronous>, transform_indices = @transform_3, window_bounds = array<i64: 32, 32>}, {pipeline_mode = #tpu.pipeline_mode<synchronous>, transform_indices = @transform_4, window_bounds = array<i64: 1, 32>}, {pipeline_mode = #tpu.pipeline_mode<synchronous>, transform_indices = @transform_5, window_bounds = array<i64: 32, 32>}, {pipeline_mode = #tpu.pipeline_mode<synchronous>, transform_indices = @transform_6, window_bounds = array<i64: 1, 32>}, {transform_indices = @transform_7, window_bounds = array<i64: 4, 256>}]} {
    %c0 = arith.constant 0 : index
    %c0_0 = arith.constant 0 : index
    %c0_1 = arith.constant 0 : index
    %0 = vector.load %arg1[%c0, %c0_0, %c0_1] : memref<4x8x32xf32, #tpu.memory_space<vmem>>, vector<4x8x32xf32>
    %c0_2 = arith.constant 0 : index
    %c0_3 = arith.constant 0 : index
    %c0_4 = arith.constant 0 : index
    %1 = vector.load %arg2[%c0_2, %c0_3, %c0_4] : memref<4x16x32xf32, #tpu.memory_space<vmem>>, vector<4x16x32xf32>
    %c0_5 = arith.constant 0 : index
    %c0_6 = arith.constant 0 : index
    %c0_7 = arith.constant 0 : index
    %2 = vector.load %arg3[%c0_5, %c0_6, %c0_7] : memref<4x16x32xf32, #tpu.memory_space<vmem>>, vector<4x16x32xf32>
    %cst = arith.constant 0.176776692 : f32
    %3 = vector.broadcast %cst : f32 to vector<4x8x32xf32>
    %4 = arith.mulf %0, %3 : vector<4x8x32xf32>
    %5 = arith.truncf %4 : vector<4x8x32xf32> to vector<4x8x32xbf16>
    %6 = arith.truncf %1 : vector<4x16x32xf32> to vector<4x16x32xbf16>
    %7 = arith.truncf %2 : vector<4x16x32xf32> to vector<4x16x32xbf16>
    "tpu.trace_start"() <{level = 10 : i32, message = "bqd,bkd->bqk"}> : () -> ()
    %cst_8 = arith.constant dense<0.000000e+00> : vector<4x8x16xf32>
    %8 = tpu.matmul %5, %6, %cst_8 {dimension_numbers = #tpu.dot_dimension_numbers<[2], [2], [1], [1], [0, 0, 0, 1, 1, 1], [0], [0]>} : vector<4x8x32xbf16>, vector<4x16x32xbf16>, vector<4x8x16xf32> -> vector<4x8x16xf32>
    "tpu.trace_stop"() : () -> ()
    %cst_9 = arith.constant dense<0xFF800000> : vector<4x8xf32>
    %9 = vector.multi_reduction <maximumf>, %8, %cst_9 [2] : vector<4x8x16xf32> to vector<4x8xf32>
    %10 = vector.shape_cast %9 : vector<4x8xf32> to vector<4x8x1xf32>
    %11 = vector.broadcast %10 : vector<4x8x1xf32> to vector<4x8x16xf32>
    %12 = arith.subf %8, %11 : vector<4x8x16xf32>
    %13 = math.exp %12 : vector<4x8x16xf32>
    %cst_10 = arith.constant dense<0.000000e+00> : vector<4x8xf32>
    %14 = vector.multi_reduction <add>, %13, %cst_10 [2] : vector<4x8x16xf32> to vector<4x8xf32>
    %15 = vector.shape_cast %14 : vector<4x8xf32> to vector<4x8x1xf32>
    %16 = tpu.reciprocal %15 {approx = true} : vector<4x8x1xf32> -> vector<4x8x1xf32>
    %17 = vector.broadcast %16 : vector<4x8x1xf32> to vector<4x8x16xf32>
    %18 = arith.mulf %13, %17 : vector<4x8x16xf32>
    %19 = arith.truncf %18 : vector<4x8x16xf32> to vector<4x8x16xbf16>
    "tpu.trace_start"() <{level = 10 : i32, message = "bqk,bkd->bqd"}> : () -> ()
    %cst_11 = arith.constant dense<0.000000e+00> : vector<4x8x32xf32>
    %20 = tpu.matmul %19, %7, %cst_11 {dimension_numbers = #tpu.dot_dimension_numbers<[2], [1], [1], [2], [0, 0, 0, 1, 1, 2], [0], [0]>} : vector<4x8x16xbf16>, vector<4x16x32xbf16>, vector<4x8x32xf32> -> vector<4x8x32xf32>
    "tpu.trace_stop"() : () -> ()
    %21 = arith.addf %0, %20 : vector<4x8x32xf32>
    %c0_12 = arith.constant 0 : index
    %c0_13 = arith.constant 0 : index
    %22 = vector.load %arg4[%c0_12, %c0_13] : memref<32x32xbf16, #tpu.memory_space<vmem>>, vector<32x32xbf16>
    %c0_14 = arith.constant 0 : index
    %c0_15 = arith.constant 0 : index
    %23 = vector.load %arg6[%c0_14, %c0_15] : memref<32x32xbf16, #tpu.memory_space<vmem>>, vector<32x32xbf16>
    %c0_16 = arith.constant 0 : index
    %c0_17 = arith.constant 0 : index
    %24 = vector.load %arg5[%c0_16, %c0_17] : memref<1x32xf32, #tpu.memory_space<vmem>>, vector<1x32xf32>
    %c0_18 = arith.constant 0 : index
    %c0_19 = arith.constant 0 : index
    %25 = vector.load %arg7[%c0_18, %c0_19] : memref<1x32xf32, #tpu.memory_space<vmem>>, vector<1x32xf32>
    %26 = vector.shape_cast %21 : vector<4x8x32xf32> to vector<32x32xf32>
    %27 = arith.truncf %26 : vector<32x32xf32> to vector<32x32xbf16>
    %cst_20 = arith.constant dense<0.000000e+00> : vector<32x32xf32>
    %28 = tpu.matmul %27, %22, %cst_20 {dimension_numbers = #tpu.dot_dimension_numbers<[1], [0], [0], [1], [0, 0, 1, 1], [], []>} : vector<32x32xbf16>, vector<32x32xbf16>, vector<32x32xf32> -> vector<32x32xf32>
    %29 = vector.broadcast %24 : vector<1x32xf32> to vector<32x32xf32>
    %30 = arith.addf %28, %29 : vector<32x32xf32>
    %cst_21 = arith.constant 0.000000e+00 : f32
    %31 = vector.broadcast %cst_21 : f32 to vector<32x32xf32>
    %32 = arith.maximumf %30, %31 : vector<32x32xf32>
    %33 = arith.truncf %32 : vector<32x32xf32> to vector<32x32xbf16>
    %cst_22 = arith.constant dense<0.000000e+00> : vector<32x32xf32>
    %34 = tpu.matmul %33, %23, %cst_22 {dimension_numbers = #tpu.dot_dimension_numbers<[1], [0], [0], [1], [0, 0, 1, 1], [], []>} : vector<32x32xbf16>, vector<32x32xbf16>, vector<32x32xf32> -> vector<32x32xf32>
    %35 = vector.broadcast %25 : vector<1x32xf32> to vector<32x32xf32>
    %36 = arith.addf %34, %35 : vector<32x32xf32>
    %37 = arith.addf %36, %26 : vector<32x32xf32>
    %38 = vector.shape_cast %37 : vector<32x32xf32> to vector<4x256xf32>
    %c0_23 = arith.constant 0 : index
    %c0_24 = arith.constant 0 : index
    %39 = vector.load %arg8[%c0_23, %c0_24] : memref<4x256xf32, #tpu.memory_space<vmem>>, vector<4x256xf32>
    tpu.vector_store %arg8[%c0_23, %c0_24], %38 {strides = array<i32>} : memref<4x256xf32, #tpu.memory_space<vmem>>, vector<4x256xf32>,
    return
  }
  func.func @transform_0(%arg0: i32) -> (i32, i32, i32) {
    %c0_i32 = arith.constant 0 : i32
    %c0_i32_0 = arith.constant 0 : i32
    %c0_i32_1 = arith.constant 0 : i32
    return %arg0, %c0_i32, %c0_i32_0 : i32, i32, i32
  }
  func.func @transform_1(%arg0: i32) -> (i32, i32, i32) {
    %c0_i32 = arith.constant 0 : i32
    %c0_i32_0 = arith.constant 0 : i32
    %c0_i32_1 = arith.constant 0 : i32
    return %arg0, %c0_i32, %c0_i32_0 : i32, i32, i32
  }
  func.func @transform_2(%arg0: i32) -> (i32, i32, i32) {
    %c0_i32 = arith.constant 0 : i32
    %c0_i32_0 = arith.constant 0 : i32
    %c0_i32_1 = arith.constant 0 : i32
    return %arg0, %c0_i32, %c0_i32_0 : i32, i32, i32
  }
  func.func @transform_3(%arg0: i32) -> (i32, i32) {
    %c0_i32 = arith.constant 0 : i32
    %c0_i32_0 = arith.constant 0 : i32
    %c0_i32_1 = arith.constant 0 : i32
    return %c0_i32, %c0_i32_0 : i32, i32
  }
  func.func @transform_4(%arg0: i32) -> (i32, i32) {
    %c0_i32 = arith.constant 0 : i32
    %c0_i32_0 = arith.constant 0 : i32
    %c0_i32_1 = arith.constant 0 : i32
    return %c0_i32, %c0_i32_0 : i32, i32
  }
  func.func @transform_5(%arg0: i32) -> (i32, i32) {
    %c0_i32 = arith.constant 0 : i32
    %c0_i32_0 = arith.constant 0 : i32
    %c0_i32_1 = arith.constant 0 : i32
    return %c0_i32, %c0_i32_0 : i32, i32
  }
  func.func @transform_6(%arg0: i32) -> (i32, i32) {
    %c0_i32 = arith.constant 0 : i32
    %c0_i32_0 = arith.constant 0 : i32
    %c0_i32_1 = arith.constant 0 : i32
    return %c0_i32, %c0_i32_0 : i32, i32
  }
  func.func @transform_7(%arg0: i32) -> (i32, i32) {
    %c0_i32 = arith.constant 0 : i32
    %c0_i32_0 = arith.constant 0 : i32
    return %arg0, %c0_i32 : i32, i32
  }
}

module attributes {stable_mosaic.version = 11 : i64} {
  func.func @kernel(%arg0: i32, %arg1: memref<2x8x32xf32, #tpu.memory_space<vmem>>, %arg2: memref<2x16x32xf32, #tpu.memory_space<vmem>>, %arg3: memref<2x16x32xf32, #tpu.memory_space<vmem>>, %arg4: memref<32x32xbf16, #tpu.memory_space<vmem>>, %arg5: memref<1x32xf32, #tpu.memory_space<vmem>>, %arg6: memref<32x32xbf16, #tpu.memory_space<vmem>>, %arg7: memref<1x32xf32, #tpu.memory_space<vmem>>, %arg8: memref<2x8x32xf32, #tpu.memory_space<vmem>>) attributes {dimension_semantics = [#tpu.dimension_semantics<parallel>], iteration_bounds = array<i64: 2>, scalar_prefetch = 0 : i64, scratch_operands = 0 : i64, tpu.core_type = #tpu.core_type<tc>, window_params = [{transform_indices = @transform_0, window_bounds = array<i64: 2, 8, 32>}, {transform_indices = @transform_1, window_bounds = array<i64: 2, 16, 32>}, {transform_indices = @transform_2, window_bounds = array<i64: 2, 16, 32>}, {pipeline_mode = #tpu.pipeline_mode<synchronous>, transform_indices = @transform_3, window_bounds = array<i64: 32, 32>}, {pipeline_mode = #tpu.pipeline_mode<synchronous>, transform_indices = @transform_4, window_bounds = array<i64: 1, 32>}, {pipeline_mode = #tpu.pipeline_mode<synchronous>, transform_indices = @transform_5, window_bounds = array<i64: 32, 32>}, {pipeline_mode = #tpu.pipeline_mode<synchronous>, transform_indices = @transform_6, window_bounds = array<i64: 1, 32>}, {transform_indices = @transform_7, window_bounds = array<i64: 2, 8, 32>}]} {
    %c0 = arith.constant 0 : index
    %c0_0 = arith.constant 0 : index
    %c0_1 = arith.constant 0 : index
    %0 = vector.load %arg1[%c0, %c0_0, %c0_1] : memref<2x8x32xf32, #tpu.memory_space<vmem>>, vector<2x8x32xf32>
    %c0_2 = arith.constant 0 : index
    %c0_3 = arith.constant 0 : index
    %c0_4 = arith.constant 0 : index
    %1 = vector.load %arg2[%c0_2, %c0_3, %c0_4] : memref<2x16x32xf32, #tpu.memory_space<vmem>>, vector<2x16x32xf32>
    %c0_5 = arith.constant 0 : index
    %c0_6 = arith.constant 0 : index
    %c0_7 = arith.constant 0 : index
    %2 = vector.load %arg3[%c0_5, %c0_6, %c0_7] : memref<2x16x32xf32, #tpu.memory_space<vmem>>, vector<2x16x32xf32>
    %cst = arith.constant 0.176776692 : f32
    %3 = vector.broadcast %cst : f32 to vector<2x8x32xf32>
    %4 = arith.mulf %0, %3 : vector<2x8x32xf32>
    %5 = arith.truncf %4 : vector<2x8x32xf32> to vector<2x8x32xbf16>
    %6 = arith.truncf %1 : vector<2x16x32xf32> to vector<2x16x32xbf16>
    %7 = arith.truncf %2 : vector<2x16x32xf32> to vector<2x16x32xbf16>
    "tpu.trace_start"() <{level = 10 : i32, message = "bqd,bkd->bqk"}> : () -> ()
    %cst_8 = arith.constant dense<0.000000e+00> : vector<2x8x16xf32>
    %8 = tpu.matmul %5, %6, %cst_8 {dimension_numbers = #tpu.dot_dimension_numbers<[2], [2], [1], [1], [0, 0, 0, 1, 1, 1], [0], [0]>} : vector<2x8x32xbf16>, vector<2x16x32xbf16>, vector<2x8x16xf32> -> vector<2x8x16xf32>
    "tpu.trace_stop"() : () -> ()
    %cst_9 = arith.constant dense<0xFF800000> : vector<2x8xf32>
    %9 = vector.multi_reduction <maximumf>, %8, %cst_9 [2] : vector<2x8x16xf32> to vector<2x8xf32>
    %10 = vector.shape_cast %9 : vector<2x8xf32> to vector<2x8x1xf32>
    %11 = vector.broadcast %10 : vector<2x8x1xf32> to vector<2x8x16xf32>
    %12 = arith.subf %8, %11 : vector<2x8x16xf32>
    %13 = math.exp %12 : vector<2x8x16xf32>
    %cst_10 = arith.constant dense<0.000000e+00> : vector<2x8xf32>
    %14 = vector.multi_reduction <add>, %13, %cst_10 [2] : vector<2x8x16xf32> to vector<2x8xf32>
    %15 = vector.shape_cast %14 : vector<2x8xf32> to vector<2x8x1xf32>
    %16 = tpu.reciprocal %15 {approx = true} : vector<2x8x1xf32> -> vector<2x8x1xf32>
    %17 = vector.broadcast %16 : vector<2x8x1xf32> to vector<2x8x16xf32>
    %18 = arith.mulf %13, %17 : vector<2x8x16xf32>
    %19 = arith.truncf %18 : vector<2x8x16xf32> to vector<2x8x16xbf16>
    "tpu.trace_start"() <{level = 10 : i32, message = "bqk,bkd->bqd"}> : () -> ()
    %cst_11 = arith.constant dense<0.000000e+00> : vector<2x8x32xf32>
    %20 = tpu.matmul %19, %7, %cst_11 {dimension_numbers = #tpu.dot_dimension_numbers<[2], [1], [1], [2], [0, 0, 0, 1, 1, 2], [0], [0]>} : vector<2x8x16xbf16>, vector<2x16x32xbf16>, vector<2x8x32xf32> -> vector<2x8x32xf32>
    "tpu.trace_stop"() : () -> ()
    %21 = arith.addf %0, %20 : vector<2x8x32xf32>
    %c0_12 = arith.constant 0 : index
    %c0_13 = arith.constant 0 : index
    %22 = vector.load %arg4[%c0_12, %c0_13] : memref<32x32xbf16, #tpu.memory_space<vmem>>, vector<32x32xbf16>
    %c0_14 = arith.constant 0 : index
    %c0_15 = arith.constant 0 : index
    %23 = vector.load %arg6[%c0_14, %c0_15] : memref<32x32xbf16, #tpu.memory_space<vmem>>, vector<32x32xbf16>
    %c0_16 = arith.constant 0 : index
    %c0_17 = arith.constant 0 : index
    %24 = vector.load %arg5[%c0_16, %c0_17] : memref<1x32xf32, #tpu.memory_space<vmem>>, vector<1x32xf32>
    %c0_18 = arith.constant 0 : index
    %c0_19 = arith.constant 0 : index
    %25 = vector.load %arg7[%c0_18, %c0_19] : memref<1x32xf32, #tpu.memory_space<vmem>>, vector<1x32xf32>
    %26 = vector.shape_cast %21 : vector<2x8x32xf32> to vector<16x32xf32>
    %27 = arith.truncf %26 : vector<16x32xf32> to vector<16x32xbf16>
    %cst_20 = arith.constant dense<0.000000e+00> : vector<16x32xf32>
    %28 = tpu.matmul %27, %22, %cst_20 {dimension_numbers = #tpu.dot_dimension_numbers<[1], [0], [0], [1], [0, 0, 1, 1], [], []>} : vector<16x32xbf16>, vector<32x32xbf16>, vector<16x32xf32> -> vector<16x32xf32>
    %29 = vector.broadcast %24 : vector<1x32xf32> to vector<16x32xf32>
    %30 = arith.addf %28, %29 : vector<16x32xf32>
    %cst_21 = arith.constant 0.000000e+00 : f32
    %31 = vector.broadcast %cst_21 : f32 to vector<16x32xf32>
    %32 = arith.maximumf %30, %31 : vector<16x32xf32>
    %33 = arith.truncf %32 : vector<16x32xf32> to vector<16x32xbf16>
    %cst_22 = arith.constant dense<0.000000e+00> : vector<16x32xf32>
    %34 = tpu.matmul %33, %23, %cst_22 {dimension_numbers = #tpu.dot_dimension_numbers<[1], [0], [0], [1], [0, 0, 1, 1], [], []>} : vector<16x32xbf16>, vector<32x32xbf16>, vector<16x32xf32> -> vector<16x32xf32>
    %35 = vector.broadcast %25 : vector<1x32xf32> to vector<16x32xf32>
    %36 = arith.addf %34, %35 : vector<16x32xf32>
    %37 = arith.addf %36, %26 : vector<16x32xf32>
    %38 = vector.shape_cast %37 : vector<16x32xf32> to vector<2x8x32xf32>
    %c0_23 = arith.constant 0 : index
    %c0_24 = arith.constant 0 : index
    %c0_25 = arith.constant 0 : index
    %39 = vector.load %arg8[%c0_23, %c0_24, %c0_25] : memref<2x8x32xf32, #tpu.memory_space<vmem>>, vector<2x8x32xf32>
    tpu.vector_store %arg8[%c0_23, %c0_24, %c0_25], %38 {strides = array<i32>} : memref<2x8x32xf32, #tpu.memory_space<vmem>>, vector<2x8x32xf32>,
    return
  }
  func.func @transform_0(%arg0: i32) -> (i32, i32, i32) {
    %c0_i32 = arith.constant 0 : i32
    %c0_i32_0 = arith.constant 0 : i32
    %c0_i32_1 = arith.constant 0 : i32
    return %arg0, %c0_i32, %c0_i32_0 : i32, i32, i32
  }
  func.func @transform_1(%arg0: i32) -> (i32, i32, i32) {
    %c0_i32 = arith.constant 0 : i32
    %c0_i32_0 = arith.constant 0 : i32
    %c0_i32_1 = arith.constant 0 : i32
    return %arg0, %c0_i32, %c0_i32_0 : i32, i32, i32
  }
  func.func @transform_2(%arg0: i32) -> (i32, i32, i32) {
    %c0_i32 = arith.constant 0 : i32
    %c0_i32_0 = arith.constant 0 : i32
    %c0_i32_1 = arith.constant 0 : i32
    return %arg0, %c0_i32, %c0_i32_0 : i32, i32, i32
  }
  func.func @transform_3(%arg0: i32) -> (i32, i32) {
    %c0_i32 = arith.constant 0 : i32
    %c0_i32_0 = arith.constant 0 : i32
    %c0_i32_1 = arith.constant 0 : i32
    return %c0_i32, %c0_i32_0 : i32, i32
  }
  func.func @transform_4(%arg0: i32) -> (i32, i32) {
    %c0_i32 = arith.constant 0 : i32
    %c0_i32_0 = arith.constant 0 : i32
    %c0_i32_1 = arith.constant 0 : i32
    return %c0_i32, %c0_i32_0 : i32, i32
  }
  func.func @transform_5(%arg0: i32) -> (i32, i32) {
    %c0_i32 = arith.constant 0 : i32
    %c0_i32_0 = arith.constant 0 : i32
    %c0_i32_1 = arith.constant 0 : i32
    return %c0_i32, %c0_i32_0 : i32, i32
  }
  func.func @transform_6(%arg0: i32) -> (i32, i32) {
    %c0_i32 = arith.constant 0 : i32
    %c0_i32_0 = arith.constant 0 : i32
    %c0_i32_1 = arith.constant 0 : i32
    return %c0_i32, %c0_i32_0 : i32, i32
  }
  func.func @transform_7(%arg0: i32) -> (i32, i32, i32) {
    %c0_i32 = arith.constant 0 : i32
    %c0_i32_0 = arith.constant 0 : i32
    %c0_i32_1 = arith.constant 0 : i32
    return %arg0, %c0_i32, %c0_i32_0 : i32, i32, i32
  }
}

</mosaic_0001>

<llo_original>
// kernel: tpu_custom_call.1
$region0: #{tpu_custom_call.1}
  #allocation0 [shape = 'u32[]', space=smem, size = 0x4, offset = 0x4, fixed_abs, tag = 'smem constant byte address 0x4 - core index']
  #allocation1 [shape = 'u32[144,128]{1,0:T(1,128)}', space=vmem, size = 0x12000, scoped, tag = 'internal scratch']
  %s0 = inlined_call_operand.hbm [shape: f32[4,8,32], index: 0, kind: input, shape index: {}]
  %s1 = inlined_call_operand.hbm [shape: f32[4,16,32], index: 1, kind: input, shape index: {}]
  %s2 = inlined_call_operand.hbm [shape: f32[4,16,32], index: 2, kind: input, shape index: {}]
  %s3 = inlined_call_operand.hbm [shape: bf16[32,32], index: 3, kind: input, shape index: {}]
  %s4 = inlined_call_operand.vmem [shape: f32[1,32], index: 4, kind: input, shape index: {}]
  %s5 = inlined_call_operand.vmem [shape: bf16[32,32], index: 5, kind: input, shape index: {}]
  %s6 = inlined_call_operand.vmem [shape: f32[1,32], index: 6, kind: input, shape index: {}]
  %s7 = inlined_call_operand.hbm [shape: f32[4,8,32], index: 7, kind: output, shape index: {}]
  %s8 = sld [smem:[#allocation0]]
  $region77: #{tpu_custom_call.1} parent=0
    _
  %s10 = ssub.s32 1, %s8
  %s11 = scalar_select 0, %s10, %s8
  $region1: #{tpu_custom_call.1} parent=0
    #allocation2 [shape = 'u8[16384]{0}', space=vmem, size = 0x4000, scoped, tag = 'input window, operand 0']
    #allocation3 [shape = 's32[2]{0}', space=sflag, size = 0x8, scoped, tag = 'scoped memory for tpu_custom_call.1']
    #allocation4 [shape = 's32[2]{0}', space=sflag, size = 0x8, scoped, tag = 'scoped memory for tpu_custom_call.1']
    #allocation5 [shape = 'u8[32768]{0}', space=vmem, size = 0x8000, scoped, tag = 'input window, operand 1']
    #allocation6 [shape = 's32[2]{0}', space=sflag, size = 0x8, scoped, tag = 'scoped memory for tpu_custom_call.1']
    #allocation7 [shape = 'u8[32768]{0}', space=vmem, size = 0x8000, scoped, tag = 'input window, operand 2']
    #allocation8 [shape = 'u8[8192]{0}', space=vmem, size = 0x2000, scoped, tag = 'input window, operand 3, single buffered']
    #allocation9 [shape = 's32[1]{0}', space=sflag, size = 0x4, scoped, tag = 'scoped memory for tpu_custom_call.1']
    #allocation10 [shape = 'u8[16384]{0}', space=vmem, size = 0x4000, scoped, tag = 'output window, operand 0']
    %12 = vsyncpa [#allocation3], 0
    %s13 = scalar_lea.sflag [#allocation3], 1
    %14 = vsyncpa %s13, 0
    %15 = vsyncpa [#allocation6], 0
    %s16 = scalar_lea.sflag [#allocation6], 1
    %17 = vsyncpa %s16, 0
    %18 = vsyncpa [#allocation9], 0
    %19 = vsyncpa [#allocation4], 0
    %s20 = scalar_lea.sflag [#allocation4], 1
    %21 = vsyncpa %s20, 0
    loop: start=0, step=1, limit=4
    $region2: #{tpu_custom_call.1} parent=1 // loop_pre_header
      _
    $region3: #{tpu_custom_call.1} parent=1 // loop_header
      %s23 = sphi 0, %s27
      %p24 = scmp.ge.s32.totalorder %s23, 4
      %s33 = sphi 0, %s35
      %s36 = sphi 0, %s33
      %s37 = sphi 0, %s36
      %s53 = sphi 0, %s37
      %s59 = sphi 0, %s61
      %s62 = sphi 0, %s59
      %s63 = sphi 0, %s62
      %s79 = sphi 0, %s63
      %s85 = sphi 0, %s87
      %s88 = sphi 0, %s85
      %s89 = sphi 0, %s88
      %s105 = sphi 0, %s89
      %s109 = sphi 0, %s109
      %s111 = sphi 0, %s109
      %s112 = sphi 0, %s111
      %s126 = sphi 0, %s112
      %s130 = sphi 0, %s130
      %s132 = sphi 0, %s130
      %s133 = sphi 0, %s132
      %s147 = sphi 0, %s133
      %s151 = sphi 0, %s151
      %s153 = sphi 0, %s151
      %s154 = sphi 0, %s153
      %s168 = sphi 0, %s154
      %s172 = sphi 0, %s172
      %s174 = sphi 0, %s172
      %s175 = sphi 0, %s174
      %s189 = sphi 0, %s175
      %s195 = sphi 0, %s197
      %s198 = sphi 0, %s195
      %s199 = sphi 0, %s198
      %s215 = sphi 0, %s199
    $region4: #{tpu_custom_call.1} parent=1 // loop_header_branch
      %26 = sbr.rel (%p24) target = $region8
    $region5: #{tpu_custom_call.1} parent=1 // loop_body
      %s28 = ssub.s32 %s23, 1
      %s29 = ssub.s32 %s23, 2
      %s30 = sadd.s32 %s23, 1
      %s31 = ssub.s32 %s23, %s30
      %p32 = scmp.eq.s32.totalorder %s31, 0
      %s34 = sadd.s32 %s33, 1
      %s35 = scalar_select %p32, %s33, %s34
      %p38 = pneg %p32
      %p39 = scmp.eq.s32.totalorder %s23, 1
      %p40 = por %p38, %p39
      %p41 = scmp.ne.s32.totalorder %s33, %s36
      %p42 = scmp.eq.s32.totalorder %s23, 0
      %p43 = por %p41, %p42
      %p44 = scmp.ne.s32.totalorder %s33, %s36
      %p45 = scmp.eq.s32.totalorder %s28, 1
      %p46 = por %p44, %p45
      %p47 = scmp.ne.s32.totalorder %s36, %s37
      %p48 = scmp.eq.s32.totalorder %s28, 0
      %p49 = por %p47, %p48
      %p50 = scmp.ne.s32.totalorder %s36, %s37
      %p51 = scmp.eq.s32.totalorder %s29, 1
      %p52 = por %p50, %p51
      %p54 = scmp.ne.s32.totalorder %s37, %s53
      %p55 = scmp.eq.s32.totalorder %s29, 0
      %p56 = por %p54, %p55
      %s57 = ssub.s32 %s23, %s30
      %p58 = scmp.eq.s32.totalorder %s57, 0
      %s60 = sadd.s32 %s59, 1
      %s61 = scalar_select %p58, %s59, %s60
      %p64 = pneg %p58
      %p65 = scmp.eq.s32.totalorder %s23, 1
      %p66 = por %p64, %p65
      %p67 = scmp.ne.s32.totalorder %s59, %s62
      %p68 = scmp.eq.s32.totalorder %s23, 0
      %p69 = por %p67, %p68
      %p70 = scmp.ne.s32.totalorder %s59, %s62
      %p71 = scmp.eq.s32.totalorder %s28, 1
      %p72 = por %p70, %p71
      %p73 = scmp.ne.s32.totalorder %s62, %s63
      %p74 = scmp.eq.s32.totalorder %s28, 0
      %p75 = por %p73, %p74
      %p76 = scmp.ne.s32.totalorder %s62, %s63
      %p77 = scmp.eq.s32.totalorder %s29, 1
      %p78 = por %p76, %p77
      %p80 = scmp.ne.s32.totalorder %s63, %s79
      %p81 = scmp.eq.s32.totalorder %s29, 0
      %p82 = por %p80, %p81
      %s83 = ssub.s32 %s23, %s30
      %p84 = scmp.eq.s32.totalorder %s83, 0
      %s86 = sadd.s32 %s85, 1
      %s87 = scalar_select %p84, %s85, %s86
      %p90 = pneg %p84
      %p91 = scmp.eq.s32.totalorder %s23, 1
      %p92 = por %p90, %p91
      %p93 = scmp.ne.s32.totalorder %s85, %s88
      %p94 = scmp.eq.s32.totalorder %s23, 0
      %p95 = por %p93, %p94
      %p96 = scmp.ne.s32.totalorder %s85, %s88
      %p97 = scmp.eq.s32.totalorder %s28, 1
      %p98 = por %p96, %p97
      %p99 = scmp.ne.s32.totalorder %s88, %s89
      %p100 = scmp.eq.s32.totalorder %s28, 0
      %p101 = por %p99, %p100
      %p102 = scmp.ne.s32.totalorder %s88, %s89
      %p103 = scmp.eq.s32.totalorder %s29, 1
      %p104 = por %p102, %p103
      %p106 = scmp.ne.s32.totalorder %s89, %s105
      %p107 = scmp.eq.s32.totalorder %s29, 0
      %p108 = por %p106, %p107
      %s110 = sadd.s32 %s109, 1
      %p113 = scmp.eq.s32.totalorder %s23, 1
      %p114 = scmp.ne.s32.totalorder %s109, %s111
      %p115 = scmp.eq.s32.totalorder %s23, 0
      %p116 = por %p114, %p115
      %p117 = scmp.ne.s32.totalorder %s109, %s111
      %p118 = scmp.eq.s32.totalorder %s28, 1
      %p119 = por %p117, %p118
      %p120 = scmp.ne.s32.totalorder %s111, %s112
      %p121 = scmp.eq.s32.totalorder %s28, 0
      %p122 = por %p120, %p121
      %p123 = scmp.ne.s32.totalorder %s111, %s112
      %p124 = scmp.eq.s32.totalorder %s29, 1
      %p125 = por %p123, %p124
      %p127 = scmp.ne.s32.totalorder %s112, %s126
      %p128 = scmp.eq.s32.totalorder %s29, 0
      %p129 = por %p127, %p128
      %s131 = sadd.s32 %s130, 1
      %p134 = scmp.eq.s32.totalorder %s23, 1
      %p135 = scmp.ne.s32.totalorder %s130, %s132
      %p136 = scmp.eq.s32.totalorder %s23, 0
      %p137 = por %p135, %p136
      %p138 = scmp.ne.s32.totalorder %s130, %s132
      %p139 = scmp.eq.s32.totalorder %s28, 1
      %p140 = por %p138, %p139
      %p141 = scmp.ne.s32.totalorder %s132, %s133
      %p142 = scmp.eq.s32.totalorder %s28, 0
      %p143 = por %p141, %p142
      %p144 = scmp.ne.s32.totalorder %s132, %s133
      %p145 = scmp.eq.s32.totalorder %s29, 1
      %p146 = por %p144, %p145
      %p148 = scmp.ne.s32.totalorder %s133, %s147
      %p149 = scmp.eq.s32.totalorder %s29, 0
      %p150 = por %p148, %p149
      %s152 = sadd.s32 %s151, 1
      %p155 = scmp.eq.s32.totalorder %s23, 1
      %p156 = scmp.ne.s32.totalorder %s151, %s153
      %p157 = scmp.eq.s32.totalorder %s23, 0
      %p158 = por %p156, %p157
      %p159 = scmp.ne.s32.totalorder %s151, %s153
      %p160 = scmp.eq.s32.totalorder %s28, 1
      %p161 = por %p159, %p160
      %p162 = scmp.ne.s32.totalorder %s153, %s154
      %p163 = scmp.eq.s32.totalorder %s28, 0
      %p164 = por %p162, %p163
      %p165 = scmp.ne.s32.totalorder %s153, %s154
      %p166 = scmp.eq.s32.totalorder %s29, 1
      %p167 = por %p165, %p166
      %p169 = scmp.ne.s32.totalorder %s154, %s168
      %p170 = scmp.eq.s32.totalorder %s29, 0
      %p171 = por %p169, %p170
      %s173 = sadd.s32 %s172, 1
      %p176 = scmp.eq.s32.totalorder %s23, 1
      %p177 = scmp.ne.s32.totalorder %s172, %s174
      %p178 = scmp.eq.s32.totalorder %s23, 0
      %p179 = por %p177, %p178
      %p180 = scmp.ne.s32.totalorder %s172, %s174
      %p181 = scmp.eq.s32.totalorder %s28, 1
      %p182 = por %p180, %p181
      %p183 = scmp.ne.s32.totalorder %s174, %s175
      %p184 = scmp.eq.s32.totalorder %s28, 0
      %p185 = por %p183, %p184
      %p186 = scmp.ne.s32.totalorder %s174, %s175
      %p187 = scmp.eq.s32.totalorder %s29, 1
      %p188 = por %p186, %p187
      %p190 = scmp.ne.s32.totalorder %s175, %s189
      %p191 = scmp.eq.s32.totalorder %s29, 0
      %p192 = por %p190, %p191
      %s193 = ssub.s32 %s23, %s30
      %p194 = scmp.eq.s32.totalorder %s193, 0
      %s196 = sadd.s32 %s195, 1
      %s197 = scalar_select %p194, %s195, %s196
      %p200 = pneg %p194
      %p201 = scmp.eq.s32.totalorder %s23, 1
      %p202 = por %p200, %p201
      %p203 = scmp.ne.s32.totalorder %s195, %s198
      %p204 = scmp.eq.s32.totalorder %s23, 0
      %p205 = por %p203, %p204
      %p206 = scmp.ne.s32.totalorder %s195, %s198
      %p207 = scmp.eq.s32.totalorder %s28, 1
      %p208 = por %p206, %p207
      %p209 = scmp.ne.s32.totalorder %s198, %s199
      %p210 = scmp.eq.s32.totalorder %s28, 0
      %p211 = por %p209, %p210
      %p212 = scmp.ne.s32.totalorder %s198, %s199
      %p213 = scmp.eq.s32.totalorder %s29, 1
      %p214 = por %p212, %p213
      %p216 = scmp.ne.s32.totalorder %s199, %s215
      %p217 = scmp.eq.s32.totalorder %s29, 0
      %p218 = por %p216, %p217
      %p219 = scmp.le.s32.totalorder 1, %s23
      %p220 = scmp.lt.s32.totalorder %s23, 3
      %p221 = pnand %p219, %p220
      %p222 = pneg %p221
      // Predicated region
      $region9: #{tpu_custom_call.1} parent=5 // pred_check
        _
      $region10: #{tpu_custom_call.1} parent=5 // pred_check_branch
        %224 = sbr.rel (%p221) target = $region12
      $region11: #{tpu_custom_call.1} parent=5 // pred_region
        %s225 = ssub.s32 %s23, 1
        // Predicated region
        $region13: #{tpu_custom_call.1} parent=11 // pred_check
          %p226 = pneg %p122
        $region14: #{tpu_custom_call.1} parent=11 // pred_check_branch
          %228 = sbr.rel (%p226) target = $region16
        $region15: #{tpu_custom_call.1} parent=11 // pred_region
          %s230 = ssub.s32 256, 256
          %231 = vsyncadd [#allocation9], %s230
          %s232 = sshll.u32 [#allocation8], 4
          %s233 = int_to_ptr.vmem [resolvable:$true] %s232
          %238 = dma.hbm_to_vmem [thread:$0]  %s3, 256, %s233, [#allocation9], 64, 64, 4
        $region16: #{tpu_custom_call.1} parent=11 // pred_fallthru
          _
        // Predicated region
        $region17: #{tpu_custom_call.1} parent=11 // pred_check
          %p239 = pneg %p143
        $region18: #{tpu_custom_call.1} parent=11 // pred_check_branch
          %241 = sbr.rel (%p239) target = $region20
        $region19: #{tpu_custom_call.1} parent=11 // pred_region
          _
        $region20: #{tpu_custom_call.1} parent=11 // pred_fallthru
          _
        // Predicated region
        $region21: #{tpu_custom_call.1} parent=11 // pred_check
          %p242 = pneg %p164
        $region22: #{tpu_custom_call.1} parent=11 // pred_check_branch
          %244 = sbr.rel (%p242) target = $region24
        $region23: #{tpu_custom_call.1} parent=11 // pred_region
          _
        $region24: #{tpu_custom_call.1} parent=11 // pred_fallthru
          _
        // Predicated region
        $region25: #{tpu_custom_call.1} parent=11 // pred_check
          %p245 = pneg %p185
        $region26: #{tpu_custom_call.1} parent=11 // pred_check_branch
          %247 = sbr.rel (%p245) target = $region28
        $region27: #{tpu_custom_call.1} parent=11 // pred_region
          _
        $region28: #{tpu_custom_call.1} parent=11 // pred_fallthru
          _
      $region12: #{tpu_custom_call.1} parent=5 // pred_fallthru
        _
      %p248 = scmp.lt.s32.totalorder %s23, 2
      // Predicated region
      $region29: #{tpu_custom_call.1} parent=5 // pred_check
        %p249 = pneg %p248
      $region30: #{tpu_custom_call.1} parent=5 // pred_check_branch
        %251 = sbr.rel (%p249) target = $region32
      $region31: #{tpu_custom_call.1} parent=5 // pred_region
        // Predicated region
        $region33: #{tpu_custom_call.1} parent=31 // pred_check
          %p252 = pneg %p43
        $region34: #{tpu_custom_call.1} parent=31 // pred_check_branch
          %254 = sbr.rel (%p252) target = $region36
        $region35: #{tpu_custom_call.1} parent=31 // pred_region
          %s255 = sand.u32 %s33, 1
          %s256 = scalar_lea.sflag [#allocation3], %s255
          %s257 = sand.u32 %s33, 1
          %s258 = smul.addr %s257, 16
          %s259 = scalar_lea.vmem [#allocation2], %s258
          %s260 = smul.u32 2, %s23
          %s262 = ssub.s32 256, 256
          %263 = vsyncadd %s256, %s262
          %s264 = smul.addr %s260, 128
          %s265 = scalar_lea.hbm %s0, %s264
          %s266 = sshll.u32 %s259, 4
          %s267 = int_to_ptr.vmem [resolvable:$true] %s266
          %272 = dma.hbm_to_vmem [thread:$0]  %s265, 256, %s267, %s256, 128, 128, 8
        $region36: #{tpu_custom_call.1} parent=31 // pred_fallthru
          _
        // Predicated region
        $region37: #{tpu_custom_call.1} parent=31 // pred_check
          %p273 = pneg %p69
        $region38: #{tpu_custom_call.1} parent=31 // pred_check_branch
          %275 = sbr.rel (%p273) target = $region40
        $region39: #{tpu_custom_call.1} parent=31 // pred_region
          %s276 = sand.u32 %s23, 1
          %s277 = scalar_lea.sflag [#allocation6], %s276
          %s278 = sand.u32 %s59, 1
          %s279 = smul.addr %s278, 32
          %s280 = scalar_lea.vmem [#allocation5], %s279
          %s281 = smul.u32 2, %s23
          %s283 = ssub.s32 512, 512
          %284 = vsyncadd %s277, %s283
          %s285 = smul.addr %s281, 2
          %s286 = smul.addr %s285, 128
          %s287 = scalar_lea.hbm %s1, %s286
          %s288 = sshll.u32 %s280, 4
          %s289 = int_to_ptr.vmem [resolvable:$true] %s288
          %294 = dma.hbm_to_vmem [thread:$0]  %s287, 512, %s289, %s277, 128, 128, 8
        $region40: #{tpu_custom_call.1} parent=31 // pred_fallthru
          _
        // Predicated region
        $region41: #{tpu_custom_call.1} parent=31 // pred_check
          %p295 = pneg %p95
        $region42: #{tpu_custom_call.1} parent=31 // pred_check_branch
          %297 = sbr.rel (%p295) target = $region44
        $region43: #{tpu_custom_call.1} parent=31 // pred_region
          %s298 = sand.u32 %s23, 1
          %s299 = scalar_lea.sflag [#allocation6], %s298
          %s300 = sand.u32 %s85, 1
          %s301 = smul.addr %s300, 32
          %s302 = scalar_lea.vmem [#allocation7], %s301
          %s303 = smul.u32 2, %s23
          %s305 = ssub.s32 512, 512
          %306 = vsyncadd %s299, %s305
          %s307 = smul.addr %s303, 2
          %s308 = smul.addr %s307, 128
          %s309 = scalar_lea.hbm %s2, %s308
          %s310 = sshll.u32 %s302, 4
          %s311 = int_to_ptr.vmem [resolvable:$true] %s310
          %316 = dma.hbm_to_vmem [thread:$0]  %s309, 512, %s311, %s299, 128, 128, 8
        $region44: #{tpu_custom_call.1} parent=31 // pred_fallthru
          _
      $region32: #{tpu_custom_call.1} parent=5 // pred_fallthru
        _
      %p317 = scmp.le.s32.totalorder 1, %s23
      %p318 = scmp.lt.s32.totalorder %s23, 3
      %p319 = pnand %p317, %p318
      %p320 = pneg %p319
      // Predicated region
      $region45: #{tpu_custom_call.1} parent=5 // pred_check
        _
      $region46: #{tpu_custom_call.1} parent=5 // pred_check_branch
        %322 = sbr.rel (%p319) target = $region48
      $region47: #{tpu_custom_call.1} parent=5 // pred_region
        %s323 = ssub.s32 %s23, 1
        %s324 = sand.u32 %s36, 1
        %s325 = scalar_lea.sflag [#allocation3], %s324
        %s326 = sand.u32 %s36, 1
        %s327 = smul.addr %s326, 16
        %s328 = scalar_lea.vmem [#allocation2], %s327
        // Predicated region
        $region49: #{tpu_custom_call.1} parent=47 // pred_check
          %p329 = pneg %p49
        $region50: #{tpu_custom_call.1} parent=47 // pred_check_branch
          %331 = sbr.rel (%p329) target = $region52
        $region51: #{tpu_custom_call.1} parent=47 // pred_region
          %332 = dma.done %s325, 256
        $region52: #{tpu_custom_call.1} parent=47 // pred_fallthru
          _
        %s333 = sand.u32 %s28, 1
        %s334 = scalar_lea.sflag [#allocation6], %s333
        %s335 = sand.u32 %s62, 1
        %s336 = smul.addr %s335, 32
        %s337 = scalar_lea.vmem [#allocation5], %s336
        // Predicated region
        $region53: #{tpu_custom_call.1} parent=47 // pred_check
          %p338 = pneg %p75
        $region54: #{tpu_custom_call.1} parent=47 // pred_check_branch
          %340 = sbr.rel (%p338) target = $region56
        $region55: #{tpu_custom_call.1} parent=47 // pred_region
          %341 = dma.done %s334, 512
        $region56: #{tpu_custom_call.1} parent=47 // pred_fallthru
          _
        %s342 = sand.u32 %s28, 1
        %s343 = scalar_lea.sflag [#allocation6], %s342
        %s344 = sand.u32 %s88, 1
        %s345 = smul.addr %s344, 32
        %s346 = scalar_lea.vmem [#allocation7], %s345
        // Predicated region
        $region57: #{tpu_custom_call.1} parent=47 // pred_check
          %p347 = pneg %p101
        $region58: #{tpu_custom_call.1} parent=47 // pred_check_branch
          %349 = sbr.rel (%p347) target = $region60
        $region59: #{tpu_custom_call.1} parent=47 // pred_region
          %350 = dma.done %s343, 512
        $region60: #{tpu_custom_call.1} parent=47 // pred_fallthru
          _
        // Predicated region
        $region61: #{tpu_custom_call.1} parent=47 // pred_check
          %p351 = pneg %p122
        $region62: #{tpu_custom_call.1} parent=47 // pred_check_branch
          %353 = sbr.rel (%p351) target = $region64
        $region63: #{tpu_custom_call.1} parent=47 // pred_region
          %354 = dma.done [#allocation9], 256
        $region64: #{tpu_custom_call.1} parent=47 // pred_fallthru
          _
        %s355 = sand.u32 %s36, 1
        %s356 = scalar_lea.sflag [#allocation3], %s355
        %s357 = sand.u32 %s36, 1
        %s358 = smul.addr %s357, 16
        %s359 = scalar_lea.vmem [#allocation2], %s358
        %p360 = pneg %p49
        %p361 = pneg %p46
        %s362 = sand.u32 %s28, 1
        %s363 = scalar_lea.sflag [#allocation6], %s362
        %s364 = sand.u32 %s62, 1
        %s365 = smul.addr %s364, 32
        %s366 = scalar_lea.vmem [#allocation5], %s365
        %p367 = pneg %p75
        %p368 = pneg %p72
        %s369 = sand.u32 %s28, 1
        %s370 = scalar_lea.sflag [#allocation6], %s369
        %s371 = sand.u32 %s88, 1
        %s372 = smul.addr %s371, 32
        %s373 = scalar_lea.vmem [#allocation7], %s372
        %p374 = pneg %p101
        %p375 = pneg %p98
        %p376 = pneg %p122
        %p377 = pneg %p119
        %p378 = pneg %p143
        %p379 = pneg %p140
        %p380 = pneg %p164
        %p381 = pneg %p161
        %p382 = pneg %p185
        %p383 = pneg %p182
        %p384 = pneg %p211
        %p385 = pneg %p208
        %s386 = sand.u32 %s198, 1
        %s387 = scalar_lea.sflag [#allocation4], %s386
        %s388 = sand.u32 %s198, 1
        %s389 = smul.addr %s388, 16
        %s390 = scalar_lea.vmem [#allocation10], %s389
        %s391 = smul.u32 2, %s28
        %s392 = smul.u32 2, %s28
        %s393 = smul.u32 2, %s28
        %s394 = smul.u32 2, %s28
        %v396 = vld [vmem:[%s328] sm:$0xff]
        %v397 = vld [vmem:[%s328 + $0x8] sm:$0xff]
        %v398 = vld [vmem:[%s337] sm:$0xff]
        %v399 = vld [vmem:[%s337 + $0x8] sm:$0xff]
        %v400 = vld [vmem:[%s337 + $0x10] sm:$0xff]
        %v401 = vld [vmem:[%s337 + $0x18] sm:$0xff]
        %v402 = vld [vmem:[%s346] sm:$0xff]
        %v403 = vld [vmem:[%s346 + $0x8] sm:$0xff]
        %v404 = vld [vmem:[%s346 + $0x10] sm:$0xff]
        %v405 = vld [vmem:[%s346 + $0x18] sm:$0xff]
        %v406 = vmul.f32 %v396, 0.17677669
        %v407 = vmul.f32 %v397, 0.17677669
        %v408 = vpack.c.bf16 %v406, %v406
        %v409 = vpack.c.bf16 %v407, %v407
        %v410 = vpack.c.bf16 %v399, %v398
        %v411 = vpack.c.bf16 %v401, %v400
        %v412 = vpack.c.bf16 %v403, %v402
        %v413 = vpack.c.bf16 %v405, %v404
        %vm414 = vcmask 261120
        %v416 = vsel %vm414, %v408, 0
        %v419 = vsel %vm414, %v410, 0
        %421 = vmatprep.subr.bf16.mxu0 0
        %422 = vmatpush1.bf16.xpose.msra.mxu0 %v419
        %423 = vmatprep.subr.bf16.mxu0 0
        %424 = vmatpush1.bf16.xpose.msra.mxu0 0
        %425 = vmatprep.subr.bf16.mxu0 0
        %426 = vmatpush1.bf16.xpose.msra.mxu0 0
        %427 = vmatprep.subr.bf16.mxu0 0
        %428 = vmatpush1.bf16.xpose.msra.mxu0 0
        %429 = vmatprep.subr.bf16.mxu0 0
        %430 = vmatpush1.bf16.xpose.msra.mxu0 0
        %431 = vmatprep.subr.bf16.mxu0 0
        %432 = vmatpush1.bf16.xpose.msra.mxu0 0
        %433 = vmatprep.subr.bf16.mxu0 0
        %434 = vmatpush1.bf16.xpose.msra.mxu0 0
        %435 = vmatprep.subr.bf16.mxu0 0
        %436 = vmatpush1.bf16.xpose.msra.mxu0 0
        %437 = vmatprep.subr.bf16.mxu0 0
        %438 = vmatpush1.bf16.xpose.msra.mxu0 0
        %439 = vmatprep.subr.bf16.mxu0 0
        %440 = vmatpush1.bf16.xpose.msra.mxu0 0
        %441 = vmatprep.subr.bf16.mxu0 0
        %442 = vmatpush1.bf16.xpose.msra.mxu0 0
        %443 = vmatprep.subr.bf16.mxu0 0
        %444 = vmatpush1.bf16.xpose.msra.mxu0 0
        %445 = vmatprep.subr.bf16.mxu0 0
        %446 = vmatpush1.bf16.xpose.msra.mxu0 0
        %447 = vmatprep.subr.bf16.mxu0 0
        %448 = vmatpush1.bf16.xpose.msra.mxu0 0
        %449 = vmatprep.subr.bf16.mxu0 0
        %450 = vmatpush1.bf16.xpose.msra.mxu0 0
        %451 = vmatprep.subr.bf16.mxu0 0
        %452 = vmatpush1.bf16.xpose.msra.mxu0 0
        %453 = vmatprep.mubr.bf16.mxu0 0
        %454 = vmatmul.mubr.bf16.gmra.mrb[0].mxu0 %v416
        %v455 = vpop.f32.mrb[0].mxu0
        %v456 = vadd.f32 0.0, %v455
        %v457 = vpop.f32.mrb[0].mxu0
        %v458 = vpop.f32.mrb[0].mxu0
        %v459 = vpop.f32.mrb[0].mxu0
        %460 = vdwg.mxu0
        %v462 = vsel %vm414, %v409, 0
        %v465 = vsel %vm414, %v411, 0
        %467 = vmatprep.subr.bf16.mxu0 0
        %468 = vmatpush1.bf16.xpose.msra.mxu0 %v465
        %469 = vmatprep.subr.bf16.mxu0 0
        %470 = vmatpush1.bf16.xpose.msra.mxu0 0
        %471 = vmatprep.subr.bf16.mxu0 0
        %472 = vmatpush1.bf16.xpose.msra.mxu0 0
        %473 = vmatprep.subr.bf16.mxu0 0
        %474 = vmatpush1.bf16.xpose.msra.mxu0 0
        %475 = vmatprep.subr.bf16.mxu0 0
        %476 = vmatpush1.bf16.xpose.msra.mxu0 0
        %477 = vmatprep.subr.bf16.mxu0 0
        %478 = vmatpush1.bf16.xpose.msra.mxu0 0
        %479 = vmatprep.subr.bf16.mxu0 0
        %480 = vmatpush1.bf16.xpose.msra.mxu0 0
        %481 = vmatprep.subr.bf16.mxu0 0
        %482 = vmatpush1.bf16.xpose.msra.mxu0 0
        %483 = vmatprep.subr.bf16.mxu0 0
        %484 = vmatpush1.bf16.xpose.msra.mxu0 0
        %485 = vmatprep.subr.bf16.mxu0 0
        %486 = vmatpush1.bf16.xpose.msra.mxu0 0
        %487 = vmatprep.subr.bf16.mxu0 0
        %488 = vmatpush1.bf16.xpose.msra.mxu0 0
        %489 = vmatprep.subr.bf16.mxu0 0
        %490 = vmatpush1.bf16.xpose.msra.mxu0 0
        %491 = vmatprep.subr.bf16.mxu0 0
        %492 = vmatpush1.bf16.xpose.msra.mxu0 0
        %493 = vmatprep.subr.bf16.mxu0 0
        %494 = vmatpush1.bf16.xpose.msra.mxu0 0
        %495 = vmatprep.subr.bf16.mxu0 0
        %496 = vmatpush1.bf16.xpose.msra.mxu0 0
        %497 = vmatprep.subr.bf16.mxu0 0
        %498 = vmatpush1.bf16.xpose.msra.mxu0 0
        %499 = vmatprep.mubr.bf16.mxu0 0
        %500 = vmatmul.mubr.bf16.gmra.mrb[0].mxu0 %v462
        %v501 = vpop.f32.mrb[0].mxu0
        %v502 = vadd.f32 0.0, %v501
        %v503 = vpop.f32.mrb[0].mxu0
        %v504 = vpop.f32.mrb[0].mxu0
        %v505 = vpop.f32.mrb[0].mxu0
        %506 = vdwg.mxu0
        %vm507 = vcmask 130048
        %v508 = vsel %vm507, %v456, -inf
        %509 = vmax.xlane.f32.xlu0 %v508
        %v510 = vpop.xlane.xlu0 %509
        %v511 = vsel %vm507, %v502, -inf
        %512 = vmax.xlane.f32.xlu0 %v511
        %v513 = vpop.xlane.xlu0 %512
        %v514 = vsub.f32 %v456, %v510
        %v515 = vsub.f32 %v502, %v513
        %v516 = vmul.f32 %v514, 1.442695
        %v517 = vpow.pop %v516
        %v518 = vmul.f32 %v515, 1.442695
        %v519 = vpow.pop %v518
        %v520 = vsel %vm507, %v517, 0.0
        %521 = vadd.xlane.f32.xlu0 %v520
        %v522 = vpop.xlane.xlu0 %521
        %v523 = vsel %vm507, %v519, 0.0
        %524 = vadd.xlane.f32.xlu0 %v523
        %v525 = vpop.xlane.xlu0 %524
        %v526 = vrcp.pop %v522
        %v527 = vrcp.pop %v525
        %v528 = vmul.f32 %v517, %v526
        %v529 = vmul.f32 %v519, %v527
        %v530 = vpack.c.bf16 %v528, %v528
        %v531 = vpack.c.bf16 %v529, %v529
        %v533 = vsel %vm507, %v530, 0
        %535 = vmatprep.subr.bf16.mxu0 0
        %536 = vmatpush1.bf16.msra.mxu0 %v412
        %537 = vmatprep.subr.bf16.mxu0 0
        %538 = vmatpush1.bf16.msra.mxu0 0
        %539 = vmatprep.subr.bf16.mxu0 0
        %540 = vmatpush1.bf16.msra.mxu0 0
        %541 = vmatprep.subr.bf16.mxu0 0
        %542 = vmatpush1.bf16.msra.mxu0 0
        %543 = vmatprep.subr.bf16.mxu0 0
        %544 = vmatpush1.bf16.msra.mxu0 0
        %545 = vmatprep.subr.bf16.mxu0 0
        %546 = vmatpush1.bf16.msra.mxu0 0
        %547 = vmatprep.subr.bf16.mxu0 0
        %548 = vmatpush1.bf16.msra.mxu0 0
        %549 = vmatprep.subr.bf16.mxu0 0
        %550 = vmatpush1.bf16.msra.mxu0 0
        %551 = vmatprep.subr.bf16.mxu0 0
        %552 = vmatpush1.bf16.msra.mxu0 0
        %553 = vmatprep.subr.bf16.mxu0 0
        %554 = vmatpush1.bf16.msra.mxu0 0
        %555 = vmatprep.subr.bf16.mxu0 0
        %556 = vmatpush1.bf16.msra.mxu0 0
        %557 = vmatprep.subr.bf16.mxu0 0
        %558 = vmatpush1.bf16.msra.mxu0 0
        %559 = vmatprep.subr.bf16.mxu0 0
        %560 = vmatpush1.bf16.msra.mxu0 0
        %561 = vmatprep.subr.bf16.mxu0 0
        %562 = vmatpush1.bf16.msra.mxu0 0
        %563 = vmatprep.subr.bf16.mxu0 0
        %564 = vmatpush1.bf16.msra.mxu0 0
        %565 = vmatprep.subr.bf16.mxu0 0
        %566 = vmatpush1.bf16.msra.mxu0 0
        %567 = vmatprep.mubr.bf16.mxu0 0
        %568 = vmatmul.mubr.bf16.gmra.mrb[0].mxu0 %v533
        %v569 = vpop.f32.mrb[0].mxu0
        %v570 = vadd.f32 0.0, %v569
        %v571 = vpop.f32.mrb[0].mxu0
        %v572 = vpop.f32.mrb[0].mxu0
        %v573 = vpop.f32.mrb[0].mxu0
        %574 = vdwg.mxu0
        %v576 = vsel %vm507, %v531, 0
        %578 = vmatprep.subr.bf16.mxu0 0
        %579 = vmatpush1.bf16.msra.mxu0 %v413
        %580 = vmatprep.subr.bf16.mxu0 0
        %581 = vmatpush1.bf16.msra.mxu0 0
        %582 = vmatprep.subr.bf16.mxu0 0
        %583 = vmatpush1.bf16.msra.mxu0 0
        %584 = vmatprep.subr.bf16.mxu0 0
        %585 = vmatpush1.bf16.msra.mxu0 0
        %586 = vmatprep.subr.bf16.mxu0 0
        %587 = vmatpush1.bf16.msra.mxu0 0
        %588 = vmatprep.subr.bf16.mxu0 0
        %589 = vmatpush1.bf16.msra.mxu0 0
        %590 = vmatprep.subr.bf16.mxu0 0
        %591 = vmatpush1.bf16.msra.mxu0 0
        %592 = vmatprep.subr.bf16.mxu0 0
        %593 = vmatpush1.bf16.msra.mxu0 0
        %594 = vmatprep.subr.bf16.mxu0 0
        %595 = vmatpush1.bf16.msra.mxu0 0
        %596 = vmatprep.subr.bf16.mxu0 0
        %597 = vmatpush1.bf16.msra.mxu0 0
        %598 = vmatprep.subr.bf16.mxu0 0
        %599 = vmatpush1.bf16.msra.mxu0 0
        %600 = vmatprep.subr.bf16.mxu0 0
        %601 = vmatpush1.bf16.msra.mxu0 0
        %602 = vmatprep.subr.bf16.mxu0 0
        %603 = vmatpush1.bf16.msra.mxu0 0
        %604 = vmatprep.subr.bf16.mxu0 0
        %605 = vmatpush1.bf16.msra.mxu0 0
        %606 = vmatprep.subr.bf16.mxu0 0
        %607 = vmatpush1.bf16.msra.mxu0 0
        %608 = vmatprep.subr.bf16.mxu0 0
        %609 = vmatpush1.bf16.msra.mxu0 0
        %610 = vmatprep.mubr.bf16.mxu0 0
        %611 = vmatmul.mubr.bf16.gmra.mrb[0].mxu0 %v576
        %v612 = vpop.f32.mrb[0].mxu0
        %v613 = vadd.f32 0.0, %v612
        %v614 = vpop.f32.mrb[0].mxu0
        %v615 = vpop.f32.mrb[0].mxu0
        %v616 = vpop.f32.mrb[0].mxu0
        %617 = vdwg.mxu0
        %v618 = vadd.f32 %v396, %v570
        %v619 = vadd.f32 %v397, %v613
        %v620 = vld [vmem:[#allocation8] sm:$0xf]
        %v621 = vld [vmem:[#allocation8 + $0x4] sm:$0xf]
        %v622 = vld [vmem:[#allocation8 + $0x8] sm:$0xf]
        %v623 = vld [vmem:[#allocation8 + $0xc] sm:$0xf]
        %v624 = vld [vmem:[%s5] sm:$0xf]
        %v625 = vld [vmem:[%s5 + $0x4] sm:$0xf]
        %v626 = vld [vmem:[%s5 + $0x8] sm:$0xf]
        %v627 = vld [vmem:[%s5 + $0xc] sm:$0xf]
        %v628 = vld [vmem:[%s4] sm:$0x1]
        %v629 = vld [vmem:[%s6] sm:$0x1]
        %v630 = vpack.c.bf16 %v619, %v618
        %v632 = vlaneseq
        %v633 = vshrl.u32 %v632, 7
        %v634 = vsub.s32 0, %v633
        %v635 = vrot.slane %v628, %v634
        %v641 = vunpack.c.l.b16 %v620
        %v642 = vunpack.c.l.b16 %v621
        %v643 = vunpack.c.l.b16 %v622
        %v644 = vunpack.c.l.b16 %v623
        %v645 = vpack.c.b16 %v642, %v641
        %v646 = vpack.c.b16 %v644, %v643
        %v650 = vsel %vm414, %v630, 0
        %652 = vmatprep.subr.bf16.mxu0 0
        %653 = vmatpush1.bf16.msra.mxu0 %v645
        %654 = vmatprep.subr.bf16.mxu0 0
        %655 = vmatpush1.bf16.msra.mxu0 %v646
        %656 = vmatprep.subr.bf16.mxu0 0
        %657 = vmatpush1.bf16.msra.mxu0 0
        %658 = vmatprep.subr.bf16.mxu0 0
        %659 = vmatpush1.bf16.msra.mxu0 0
        %660 = vmatprep.subr.bf16.mxu0 0
        %661 = vmatpush1.bf16.msra.mxu0 0
        %662 = vmatprep.subr.bf16.mxu0 0
        %663 = vmatpush1.bf16.msra.mxu0 0
        %664 = vmatprep.subr.bf16.mxu0 0
        %665 = vmatpush1.bf16.msra.mxu0 0
        %666 = vmatprep.subr.bf16.mxu0 0
        %667 = vmatpush1.bf16.msra.mxu0 0
        %668 = vmatprep.subr.bf16.mxu0 0
        %669 = vmatpush1.bf16.msra.mxu0 0
        %670 = vmatprep.subr.bf16.mxu0 0
        %671 = vmatpush1.bf16.msra.mxu0 0
        %672 = vmatprep.subr.bf16.mxu0 0
        %673 = vmatpush1.bf16.msra.mxu0 0
        %674 = vmatprep.subr.bf16.mxu0 0
        %675 = vmatpush1.bf16.msra.mxu0 0
        %676 = vmatprep.subr.bf16.mxu0 0
        %677 = vmatpush1.bf16.msra.mxu0 0
        %678 = vmatprep.subr.bf16.mxu0 0
        %679 = vmatpush1.bf16.msra.mxu0 0
        %680 = vmatprep.subr.bf16.mxu0 0
        %681 = vmatpush1.bf16.msra.mxu0 0
        %682 = vmatprep.subr.bf16.mxu0 0
        %683 = vmatpush1.bf16.msra.mxu0 0
        %684 = vmatprep.mubr.bf16.mxu0 0
        %685 = vmatmul.mubr.bf16.gmra.mrb[0].mxu0 %v650
        %v686 = vpop.f32.mrb[0].mxu0
        %v687 = vadd.f32 %v635, %v686
        %v688 = vpop.f32.mrb[0].mxu0
        %v689 = vpop.f32.mrb[0].mxu0
        %v690 = vadd.f32 %v635, %v689
        %v691 = vpop.f32.mrb[0].mxu0
        %692 = vdwg.mxu0
        %v693 = vmax.f32 %v687, 0.0
        %v694 = vmax.f32 %v690, 0.0
        %v695 = vpack.c.bf16 %v694, %v693
        %v697 = vlaneseq
        %v698 = vshrl.u32 %v697, 7
        %v699 = vsub.s32 0, %v698
        %v700 = vrot.slane %v629, %v699
        %v706 = vunpack.c.l.b16 %v624
        %v707 = vunpack.c.l.b16 %v625
        %v708 = vunpack.c.l.b16 %v626
        %v709 = vunpack.c.l.b16 %v627
        %v710 = vpack.c.b16 %v707, %v706
        %v711 = vpack.c.b16 %v709, %v708
        %v715 = vsel %vm414, %v695, 0
        %717 = vmatprep.subr.bf16.mxu0 0
        %718 = vmatpush1.bf16.msra.mxu0 %v710
        %719 = vmatprep.subr.bf16.mxu0 0
        %720 = vmatpush1.bf16.msra.mxu0 %v711
        %721 = vmatprep.subr.bf16.mxu0 0
        %722 = vmatpush1.bf16.msra.mxu0 0
        %723 = vmatprep.subr.bf16.mxu0 0
        %724 = vmatpush1.bf16.msra.mxu0 0
        %725 = vmatprep.subr.bf16.mxu0 0
        %726 = vmatpush1.bf16.msra.mxu0 0
        %727 = vmatprep.subr.bf16.mxu0 0
        %728 = vmatpush1.bf16.msra.mxu0 0
        %729 = vmatprep.subr.bf16.mxu0 0
        %730 = vmatpush1.bf16.msra.mxu0 0
        %731 = vmatprep.subr.bf16.mxu0 0
        %732 = vmatpush1.bf16.msra.mxu0 0
        %733 = vmatprep.subr.bf16.mxu0 0
        %734 = vmatpush1.bf16.msra.mxu0 0
        %735 = vmatprep.subr.bf16.mxu0 0
        %736 = vmatpush1.bf16.msra.mxu0 0
        %737 = vmatprep.subr.bf16.mxu0 0
        %738 = vmatpush1.bf16.msra.mxu0 0
        %739 = vmatprep.subr.bf16.mxu0 0
        %740 = vmatpush1.bf16.msra.mxu0 0
        %741 = vmatprep.subr.bf16.mxu0 0
        %742 = vmatpush1.bf16.msra.mxu0 0
        %743 = vmatprep.subr.bf16.mxu0 0
        %744 = vmatpush1.bf16.msra.mxu0 0
        %745 = vmatprep.subr.bf16.mxu0 0
        %746 = vmatpush1.bf16.msra.mxu0 0
        %747 = vmatprep.subr.bf16.mxu0 0
        %748 = vmatpush1.bf16.msra.mxu0 0
        %749 = vmatprep.mubr.bf16.mxu0 0
        %750 = vmatmul.mubr.bf16.gmra.mrb[0].mxu0 %v715
        %v751 = vpop.f32.mrb[0].mxu0
        %v752 = vadd.f32 %v700, %v751
        %v753 = vpop.f32.mrb[0].mxu0
        %v754 = vpop.f32.mrb[0].mxu0
        %v755 = vadd.f32 %v700, %v754
        %v756 = vpop.f32.mrb[0].mxu0
        %757 = vdwg.mxu0
        %v758 = vadd.f32 %v752, %v618
        %v759 = vadd.f32 %v755, %v619
        %760 = vst.msk [vmem:[%s390] sm:$0xff] %vm414, %v758
        %761 = vst.msk [vmem:[%s390 + $0x8] sm:$0xff] %vm414, %v759
        %s762 = sand.u32 %s198, 1
        %s763 = scalar_lea.sflag [#allocation4], %s762
        %s764 = sand.u32 %s198, 1
        %s765 = smul.addr %s764, 16
        %s766 = scalar_lea.vmem [#allocation10], %s765
        // Predicated region
        $region65: #{tpu_custom_call.1} parent=47 // pred_check
          %p767 = pneg %p208
        $region66: #{tpu_custom_call.1} parent=47 // pred_check_branch
          %769 = sbr.rel (%p767) target = $region68
        $region67: #{tpu_custom_call.1} parent=47 // pred_region
          %s770 = smul.u32 2, %s28
          %s772 = ssub.s32 256, 256
          %773 = vsyncadd %s763, %s772
          %s774 = smul.addr %s770, 128
          %s775 = scalar_lea.hbm %s7, %s774
          %s776 = sshll.u32 %s766, 4
          %s777 = int_to_ptr.vmem [resolvable:$true] %s776
          %782 = dma.vmem_to_hbm [thread:$0]  %s777, 256, %s775, %s763, 128, 128, 8
        $region68: #{tpu_custom_call.1} parent=47 // pred_fallthru
          _
      $region48: #{tpu_custom_call.1} parent=5 // pred_fallthru
        _
      %p783 = scmp.le.s32.totalorder 2, %s23
      // Predicated region
      $region69: #{tpu_custom_call.1} parent=5 // pred_check
        %p784 = pneg %p783
      $region70: #{tpu_custom_call.1} parent=5 // pred_check_branch
        %786 = sbr.rel (%p784) target = $region72
      $region71: #{tpu_custom_call.1} parent=5 // pred_region
        %s787 = ssub.s32 %s23, 2
        // Predicated region
        $region73: #{tpu_custom_call.1} parent=71 // pred_check
          %p788 = pneg %p214
        $region74: #{tpu_custom_call.1} parent=71 // pred_check_branch
          %790 = sbr.rel (%p788) target = $region76
        $region75: #{tpu_custom_call.1} parent=71 // pred_region
          %s791 = sand.u32 %s199, 1
          %s792 = scalar_lea.sflag [#allocation4], %s791
          %s793 = sand.u32 %s199, 1
          %s794 = smul.addr %s793, 16
          %s795 = scalar_lea.vmem [#allocation10], %s794
          %796 = dma.done %s792, 256
        $region76: #{tpu_custom_call.1} parent=71 // pred_fallthru
          _
      $region72: #{tpu_custom_call.1} parent=5 // pred_fallthru
        _
    $region6: #{tpu_custom_call.1} parent=1 // loop_footer
      %s27 = sadd.s32 1, %s23
    $region7: #{tpu_custom_call.1} parent=1 // loop_footer_branch
      %22 = sbr.rel target = $region3
    $region8: #{tpu_custom_call.1} parent=1 // loop_exit
      _
    %797 = vsyncpa [#allocation3], 1
    %s798 = scalar_lea.sflag [#allocation3], 1
    %799 = vsyncpa %s798, 1
    %800 = vsyncpa [#allocation6], 1
    %s801 = scalar_lea.sflag [#allocation6], 1
    %802 = vsyncpa %s801, 1
    %803 = vsyncpa [#allocation9], 1
    %804 = vsyncpa [#allocation4], 1
    %s805 = scalar_lea.sflag [#allocation4], 1
    %806 = vsyncpa %s805, 1

</llo_original>
